<compile_context>
chip_gen: v7x
topology: tpu7x:2x2x1
jax: 0.10.0
libtpu: 0.0.40
codegen_flags: <defaults>
</compile_context>

<pallas_src>
import functools
import math

import jax
import jax.numpy as jnp
from jax.experimental import pallas as pl
from jax.experimental.pallas import tpu as pltpu

_LANE = 128                 # vreg lane width
_SUBLANE_F32 = 8            # f32 sublane count
_PAD_COLS = 512             # lane-dense width for the flatten-and-pad fallback
_BLOCK_BUDGET = 4 << 20     # ~4 MiB per block (85-90% of HBM roofline on all gens)
_TINY_BYTES = 1 << 20       # gridless single-block path below this
_VMEM_LIMIT = 32 << 20      # 2 in + 2 out double buffers fit with headroom
_SQRT_2_OVER_PI = math.sqrt(2.0 / math.pi)


def _gelu(x):
    # Exact translation of the PyTorch module (tanh approximation).
    return 0.5 * x * (1.0 + jnp.tanh(_SQRT_2_OVER_PI * (x + 0.044715 * (x * x * x))))


def _gelu_kernel(x_ref, o_ref, *, compute_dtype):
    x = x_ref[...].astype(compute_dtype)
    o_ref[...] = _gelu(x).astype(o_ref.dtype)


def _device_kind():
    try:
        return jax.devices()[0].device_kind.lower()
    except Exception:
        return ""


def _has_native_bf16_eup():
    # v6e/v7x have bf16 VALU + EUP paths; v5e (and unknown chips) stay on f32.
    kind = _device_kind()
    return any(tag in kind for tag in ("v6", "v7", "7x", "trillium"))


def _multi_tensorcore():
    # v7x has 2 TensorCores per chip; only then is a forced >=4-block split useful.
    kind = _device_kind()
    return ("v7" in kind) or ("7x" in kind)


def _compute_dtype_for(dtype):
    if jnp.dtype(dtype) == jnp.dtype(jnp.bfloat16) and _has_native_bf16_eup():
        return jnp.bfloat16
    return jnp.float32


def _pick_block(rows, cols, itemsize, sublane):
    """Budget-sized (block_rows, block_cols): block_cols a multiple of 128,
    block_rows a multiple of the dtype's sublane count (or == rows if tiny)."""
    max_cols = max(_LANE, (_BLOCK_BUDGET // (sublane * itemsize)) // _LANE * _LANE)
    block_cols = cols if cols <= max_cols else max_cols
    max_rows = max(sublane,
                   (_BLOCK_BUDGET // (block_cols * itemsize)) // sublane * sublane)
    if rows <= sublane:
        block_rows = rows                       # block dim == full array dim
    else:
        rows_padded = pl.cdiv(rows, sublane) * sublane
        block_rows = min(rows_padded, max_rows)
    return block_rows, block_cols


def pallas_gelu(x):
    if x.size == 0:
        return x
    orig_shape = x.shape
    n = x.size
    dtype = x.dtype
    itemsize = jnp.dtype(dtype).itemsize
    sublane = max(_SUBLANE_F32, 32 // itemsize)     # 8 f32 / 16 bf16 / 32 int8
    kernel = functools.partial(_gelu_kernel, compute_dtype=_compute_dtype_for(dtype))

    if x.ndim >= 1 and x.shape[-1] % _LANE == 0:
        # Fast path: the caller's layout is already lane-dense; ragged row
        # counts are handled by a cdiv grid (padded last block), so no
        # wrapper-side jnp.pad / extra HBM round trip is needed here.
        cols = x.shape[-1]
        rows = n // cols
        x2d = x.reshape(rows, cols)
        pad = 0
    else:
        # Fallback (last dim not a multiple of 128): flatten and pad to a
        # multiple of 512 lanes. GELU(0)=0 and the padded tail is sliced away.
        cols = _PAD_COLS
        n_pad = pl.cdiv(n, cols) * cols
        pad = n_pad - n
        flat = x.reshape(-1)
        if pad:
            flat = jnp.pad(flat, (0, pad))
        rows = n_pad // cols
        x2d = flat.reshape(rows, cols)

    total_bytes = rows * cols * itemsize
    if total_bytes <= _TINY_BYTES:
        # Truly tiny: one full-array block, no grid / pipeline bookkeeping.
        out2d = pl.pallas_call(
            kernel,
            out_shape=jax.ShapeDtypeStruct((rows, cols), dtype),
        )(x2d)
    else:
        block_rows, block_cols = _pick_block(rows, cols, itemsize, sublane)
        grid_r = pl.cdiv(rows, block_rows)
        grid_c = pl.cdiv(cols, block_cols)
        # Megacore balance (v7x only): don't let the biggest-block heuristic
        # collapse the grid to <4 blocks, or one TensorCore idles.
        if _multi_tensorcore() and grid_r * grid_c < 4 and rows >= 4 * sublane:
            block_rows = max(sublane, (rows // (4 * sublane)) * sublane)
            grid_r = pl.cdiv(rows, block_rows)
        out2d = pl.pallas_call(
            kernel,
            out_shape=jax.ShapeDtypeStruct((rows, cols), dtype),
            grid=(grid_r, grid_c),
            in_specs=[pl.BlockSpec((block_rows, block_cols), lambda i, j: (i, j))],
            out_specs=pl.BlockSpec((block_rows, block_cols), lambda i, j: (i, j)),
            compiler_params=pltpu.CompilerParams(
                dimension_semantics=("parallel", "parallel"),
                vmem_limit_bytes=_VMEM_LIMIT),
        )(x2d)

    if pad:
        return out2d.reshape(-1)[:n].reshape(orig_shape)
    return out2d.reshape(orig_shape)


if __name__ == "__main__":
    key = jax.random.PRNGKey(0)
    k1, k2, k3, k4 = jax.random.split(key, 4)

    def ref_gelu(a):
        return _gelu(a.astype(jnp.float32)).astype(a.dtype)

    # 1) Lane-dense tiny fast path (single full-array block).
    x1 = jax.random.normal(k1, (8, 256), jnp.float32)
    y1 = jax.block_until_ready(pallas_gelu(x1))
    assert y1.shape == x1.shape
    assert jnp.allclose(y1, ref_gelu(x1), atol=1e-5, rtol=1e-5)

    # 2) Ragged last dim -> flatten-and-pad fallback.
    x2 = jax.random.normal(k2, (2, 4, 50), jnp.float32)
    y2 = jax.block_until_ready(pallas_gelu(x2))
    assert y2.shape == x2.shape
    assert jnp.allclose(y2, ref_gelu(x2), atol=1e-5, rtol=1e-5)

    # 3) Gridded path with a ragged row count (padded last block).
    x3 = jax.random.normal(k3, (300, 1024), jnp.float32)
    y3 = jax.block_until_ready(pallas_gelu(x3))
    assert y3.shape == x3.shape
    assert jnp.allclose(y3, ref_gelu(x3), atol=1e-5, rtol=1e-5)

    # 4) bf16 input (native bf16 compute on v6e/v7x, f32 elsewhere).
    x4 = jax.random.normal(k4, (16, 256), jnp.float32).astype(jnp.bfloat16)
    y4 = jax.block_until_ready(pallas_gelu(x4))
    assert y4.shape == x4.shape
    assert jnp.allclose(y4.astype(jnp.float32),
                        _gelu(x4.astype(jnp.float32)),
                        atol=3e-2, rtol=3e-2)

    print("KERNEL_OK")
</pallas_src>

<mosaic_0001>
module attributes {stable_mosaic.version = 11 : i64} {
  func.func @_gelu_kernel(%arg0: memref<8x256xf32, #tpu.memory_space<vmem>>, %arg1: memref<8x256xf32, #tpu.memory_space<vmem>>) attributes {dimension_semantics = [], scalar_prefetch = 0 : i64, scratch_operands = 0 : i64, tpu.core_type = #tpu.core_type<tc>} {
    %c0 = arith.constant 0 : index
    %c0_0 = arith.constant 0 : index
    %0 = vector.load %arg0[%c0, %c0_0] : memref<8x256xf32, #tpu.memory_space<vmem>>, vector<8x256xf32>
    %cst = arith.constant 5.000000e-01 : f32
    %1 = vector.broadcast %cst : f32 to vector<8x256xf32>
    %2 = arith.mulf %1, %0 : vector<8x256xf32>
    %3 = arith.mulf %0, %0 : vector<8x256xf32>
    %4 = arith.mulf %3, %0 : vector<8x256xf32>
    %cst_1 = arith.constant 4.471500e-02 : f32
    %5 = vector.broadcast %cst_1 : f32 to vector<8x256xf32>
    %6 = arith.mulf %5, %4 : vector<8x256xf32>
    %7 = arith.addf %0, %6 : vector<8x256xf32>
    %cst_2 = arith.constant 0.797884583 : f32
    %8 = vector.broadcast %cst_2 : f32 to vector<8x256xf32>
    %9 = arith.mulf %8, %7 : vector<8x256xf32>
    %10 = math.tanh %9 : vector<8x256xf32>
    %cst_3 = arith.constant 1.000000e+00 : f32
    %11 = vector.broadcast %cst_3 : f32 to vector<8x256xf32>
    %12 = arith.addf %11, %10 : vector<8x256xf32>
    %13 = arith.mulf %2, %12 : vector<8x256xf32>
    %c0_4 = arith.constant 0 : index
    %c0_5 = arith.constant 0 : index
    %14 = vector.load %arg1[%c0_4, %c0_5] : memref<8x256xf32, #tpu.memory_space<vmem>>, vector<8x256xf32>
    tpu.vector_store %arg1[%c0_4, %c0_5], %13 {strides = array<i32>} : memref<8x256xf32, #tpu.memory_space<vmem>>, vector<8x256xf32>,
    return
  }
}

</mosaic_0001>

<llo_original>
// kernel: tpu_custom_call.1
$region0: #{tpu_custom_call.1}
  #allocation0 [shape = 'u32[]', space=smem, size = 0x4, offset = 0x4, fixed_abs, tag = 'smem constant byte address 0x4 - core index']
  #allocation1 [shape = 'u32[144,128]{1,0:T(1,128)}', space=vmem, size = 0x12000, scoped, tag = 'internal scratch']
  %s0 = inlined_call_operand.hbm [shape: f32[8,256], index: 0, kind: input, shape index: {}]
  %s1 = inlined_call_operand.hbm [shape: f32[8,256], index: 1, kind: output, shape index: {}]
  %s2 = sld [smem:[#allocation0]]
  $region18: #{tpu_custom_call.1} parent=0
    _
  %s4 = ssub.s32 1, %s2
  %s5 = scalar_select 0, %s4, %s2
  $region1: #{tpu_custom_call.1} parent=0
    #allocation2 [shape = 'u8[8192]{0}', space=vmem, size = 0x2000, scoped, tag = 'input window, operand 0, single buffered']
    #allocation3 [shape = 's32[1]{0}', space=sflag, size = 0x4, scoped, tag = 'scoped memory for tpu_custom_call.1']
    #allocation4 [shape = 's32[1]{0}', space=sflag, size = 0x4, scoped, tag = 'scoped memory for tpu_custom_call.1']
    #allocation5 [shape = 'u8[8192]{0}', space=vmem, size = 0x2000, scoped, tag = 'output window, operand 0, single buffered']
    %6 = vsyncpa [#allocation3], 0
    %7 = vsyncpa [#allocation4], 0
    // Predicated region
    $region2: #{tpu_custom_call.1} parent=1 // pred_check
      _
    $region3: #{tpu_custom_call.1} parent=1 // pred_check_branch
      %9 = sbr.rel (0) target = $region5
    $region4: #{tpu_custom_call.1} parent=1 // pred_region
      %s11 = ssub.s32 256, 256
      %12 = vsyncadd [#allocation3], %s11
      %s14 = sshll.u32 [#allocation2], 4
      %s15 = int_to_ptr.vmem [resolvable:$true] %s14
      %17 = dma.hbm_to_vmem [thread:$0]  %s0, 256, %s15, [#allocation3]
    $region5: #{tpu_custom_call.1} parent=1 // pred_fallthru
      _
    // Predicated region
    $region6: #{tpu_custom_call.1} parent=1 // pred_check
      _
    $region7: #{tpu_custom_call.1} parent=1 // pred_check_branch
      %19 = sbr.rel (0) target = $region9
    $region8: #{tpu_custom_call.1} parent=1 // pred_region
      %20 = dma.done [#allocation3], 256
    $region9: #{tpu_custom_call.1} parent=1 // pred_fallthru
      _
    %v21 = vld [vmem:[#allocation2] sm:$0xff]
    %v22 = vld [vmem:[#allocation2 + $0x8] sm:$0xff]
    %v23 = vmul.f32 %v21, 0.5
    %v24 = vmul.f32 %v22, 0.5
    %v25 = vmul.f32 %v21, %v21
    %v26 = vmul.f32 %v22, %v22
    %v27 = vmul.f32 %v25, %v21
    %v28 = vmul.f32 %v26, %v22
    %v29 = vmul.f32 %v27, 0.044715
    %v30 = vmul.f32 %v28, 0.044715
    %v31 = vadd.f32 %v21, %v29
    %v32 = vadd.f32 %v22, %v30
    %v33 = vmul.f32 %v31, 0.7978846
    %v34 = vmul.f32 %v32, 0.7978846
    %v35 = vtanh.pop %v33
    %v36 = vtanh.pop %v34
    %v37 = vadd.f32 %v35, 1.0
    %v38 = vadd.f32 %v36, 1.0
    %v39 = vmul.f32 %v23, %v37
    %v40 = vmul.f32 %v24, %v38
    %41 = vst [vmem:[#allocation5] sm:$0xff] %v39
    %42 = vst [vmem:[#allocation5 + $0x8] sm:$0xff] %v40
    // Predicated region
    $region10: #{tpu_custom_call.1} parent=1 // pred_check
      _
    $region11: #{tpu_custom_call.1} parent=1 // pred_check_branch
      %44 = sbr.rel (0) target = $region13
    $region12: #{tpu_custom_call.1} parent=1 // pred_region
      %s46 = ssub.s32 256, 256
      %47 = vsyncadd [#allocation4], %s46
      %s49 = sshll.u32 [#allocation5], 4
      %s50 = int_to_ptr.vmem [resolvable:$true] %s49
      %52 = dma.vmem_to_hbm [thread:$0]  %s50, 256, %s1, [#allocation4]
    $region13: #{tpu_custom_call.1} parent=1 // pred_fallthru
      _
    // Predicated region
    $region14: #{tpu_custom_call.1} parent=1 // pred_check
      _
    $region15: #{tpu_custom_call.1} parent=1 // pred_check_branch
      %54 = sbr.rel (0) target = $region17
    $region16: #{tpu_custom_call.1} parent=1 // pred_region
      %55 = dma.done [#allocation4], 256
    $region17: #{tpu_custom_call.1} parent=1 // pred_fallthru
      _
    %56 = vsyncpa [#allocation3], 1
    %57 = vsyncpa [#allocation4], 1

</llo_original>
